<compile_context>
chip_gen: v6e
topology: v6e:2x2x1
jax: 0.10.0
libtpu: 0.0.40
codegen_flags: <defaults>
</compile_context>

<pallas_src>
import functools

import jax
import jax.numpy as jnp
from jax import lax
from jax.experimental import pallas as pl
from jax.experimental.pallas import tpu as pltpu

C = 80      # channels (fixed by BatchNorm1d(80))
K = 5       # conv kernel size
PAD = 2     # conv padding
EPS = 1e-5  # BatchNorm eps (PyTorch default)


def _stats_kernel(x_ref, stats_ref, edges_ref, *, l_tile, true_l):
    """Per-batch partial sum / sum-of-squares of relu(x) + raw tile edge columns."""
    j = pl.program_id(1)

    @pl.when(j == 0)
    def _init():
        stats_ref[...] = jnp.zeros_like(stats_ref)

    x = x_ref[0]                                                  # (C, L_TILE) f32
    col = j * l_tile + lax.broadcasted_iota(jnp.int32, (1, l_tile), 1)
    # Columns past the true length (ragged last tile) hold unspecified data;
    # select them to exactly zero before accumulating.
    h = jnp.where(col < true_l, jnp.maximum(x, 0.0), 0.0)
    s1 = jnp.sum(h, axis=1, keepdims=True)                        # (C, 1)
    s2 = jnp.sum(h * h, axis=1, keepdims=True)                    # (C, 1)
    stats_ref[0] += jnp.concatenate([s1, s2], axis=1)             # (C, 2)

    # Raw edge columns of this tile (first PAD / last PAD); consumed as the conv
    # halo by the neighbouring tiles in the main pass (masked there if OOB).
    edges_ref[0, 0] = jnp.concatenate([x[:, :PAD], x[:, l_tile - PAD:]], axis=1)


def _main_kernel(x_ref, edges_ref, scale_ref, shift_ref, w_ref, o_ref,
                 *, l_tile, true_l):
    """relu -> BN (folded scale/shift) -> conv1d(k=5, pad=2) as ONE MXU matmul
    -> + residual, for one (batch, L-tile) block."""
    li = pl.program_id(1)
    nl = pl.num_programs(1)

    x = x_ref[0]                                   # (C, L_TILE) f32, residual
    scale = scale_ref[...]                         # (C, 1) = gamma * rsqrt(var+eps)
    shift = shift_ref[...]                         # (C, 1) = beta - mean * scale

    # ReLU + folded BatchNorm affine (f32, VPU).  Columns past the true length
    # must be exactly zero: they act as the conv's zero padding.
    lane = lax.broadcasted_iota(jnp.int32, (1, l_tile), 1)
    h = jnp.where(li * l_tile + lane < true_l,
                  jnp.maximum(x, 0.0) * scale + shift, 0.0)
    hb = h.astype(jnp.bfloat16)

    # Halo columns (2 left / 2 right) from the neighbouring tiles' edge columns
    # (delivered once per batch); clamp the neighbour index and mask boundaries.
    prev = edges_ref[0, jnp.maximum(li - 1, 0)]                   # (C, 2*PAD)
    nxt = edges_ref[0, jnp.minimum(li + 1, nl - 1)]               # (C, 2*PAD)
    hpos = lax.broadcasted_iota(jnp.int32, (1, PAD), 1)
    lcol = li * l_tile - PAD + hpos                # global columns of the left halo
    rcol = (li + 1) * l_tile + hpos                # global columns of the right halo
    left = jnp.where(lcol >= 0,
                     jnp.maximum(prev[:, PAD:], 0.0) * scale + shift, 0.0)
    right = jnp.where(rcol < true_l,
                      jnp.maximum(nxt[:, :PAD], 0.0) * scale + shift, 0.0)
    leftb = left.astype(jnp.bfloat16)              # (C, PAD)
    rightb = right.astype(jnp.bfloat16)            # (C, PAD)

    # im2col operand: row block k holds the activation shifted so that output
    # column c sees input column c + k - PAD.  Shifts run on the XLU
    # (pltpu.roll); the 4 halo columns are inserted with lane-masked selects.
    t0 = pltpu.roll(hb, shift=PAD, axis=1)                        # needs h[c-2]
    t0 = jnp.where(lane == 0, leftb[:, 0:1], t0)
    t0 = jnp.where(lane == 1, leftb[:, 1:2], t0)
    t1 = pltpu.roll(hb, shift=1, axis=1)                          # needs h[c-1]
    t1 = jnp.where(lane == 0, leftb[:, 1:2], t1)
    t2 = hb                                                       # needs h[c]
    t3 = pltpu.roll(hb, shift=l_tile - 1, axis=1)                 # needs h[c+1]
    t3 = jnp.where(lane == l_tile - 1, rightb[:, 0:1], t3)
    t4 = pltpu.roll(hb, shift=l_tile - PAD, axis=1)               # needs h[c+2]
    t4 = jnp.where(lane == l_tile - 2, rightb[:, 0:1], t4)
    t4 = jnp.where(lane == l_tile - 1, rightb[:, 1:2], t4)
    im2col = jnp.concatenate([t0, t1, t2, t3, t4], axis=0)        # (K*C, L_TILE) bf16

    # Single 400-deep contraction on the MXU, f32 accumulation.
    acc = jnp.dot(w_ref[...], im2col, preferred_element_type=jnp.float32)

    o_ref[0] = (acc + x).astype(o_ref.dtype)       # residual add, lane-dense store


def residual_block(x, w_oik, gamma, beta, *, l_tile=1024):
    """x: (N, 80, L) f32 (PyTorch NCL layout); w_oik: (C_out, C_in, K);
    gamma/beta: (80,) BatchNorm affine params.  Returns (N, 80, L) f32."""
    n, c, true_l = x.shape
    assert c == C and w_oik.shape == (C, C, K)
    assert l_tile % 128 == 0 and l_tile >= 2 * PAD
    l_tiles = int(pl.cdiv(true_l, l_tile))

    # --- pass 1: per-batch BN partial stats of relu(x) + tile edge columns ----
    stats_kernel = functools.partial(_stats_kernel, l_tile=l_tile, true_l=true_l)
    stats, edges = pl.pallas_call(
        stats_kernel,
        out_shape=(jax.ShapeDtypeStruct((n, C, 2), jnp.float32),
                   jax.ShapeDtypeStruct((n, l_tiles, C, 2 * PAD), jnp.float32)),
        grid_spec=pltpu.PrefetchScalarGridSpec(
            num_scalar_prefetch=0,
            grid=(n, l_tiles),
            in_specs=[pl.BlockSpec((1, C, l_tile), lambda i, j: (i, 0, j))],
            out_specs=(pl.BlockSpec((1, C, 2), lambda i, j: (i, 0, 0)),
                       pl.BlockSpec((1, 1, C, 2 * PAD), lambda i, j: (i, j, 0, 0))),
        ),
        compiler_params=pltpu.CompilerParams(
            dimension_semantics=("parallel", "arbitrary"),
            vmem_limit_bytes=32 * 1024 * 1024),
        cost_estimate=pl.CostEstimate(
            flops=3 * n * C * true_l,
            transcendentals=0,
            bytes_accessed=n * C * true_l * 4
            + n * C * 2 * 4 + n * l_tiles * C * 2 * PAD * 4),
    )(x)

    # Finalize the batch statistics in JAX (tiny (C,)-sized math).
    count = n * true_l
    s = jnp.sum(stats, axis=0)                             # (C, 2)
    mean = s[:, 0] / count
    var = jnp.maximum(s[:, 1] / count - mean * mean, 0.0)  # biased var, clamped >= 0
    inv = lax.rsqrt(var + EPS)
    g = gamma.reshape(-1).astype(jnp.float32)
    b = beta.reshape(-1).astype(jnp.float32)
    scale = (g * inv).reshape(C, 1)
    shift = (b - mean * g * inv).reshape(C, 1)
    # TODO(synk): running_mean/running_var buffer updates are a training-time
    # side effect with no influence on the forward output; not materialized.

    # Fold the conv weight to (C_out, K*C_in) bf16 for the single-matmul im2col
    # form: w_folded[o, k*C + i] = w_oik[o, i, k].
    w_folded = jnp.transpose(w_oik, (0, 2, 1)).reshape(C, K * C).astype(jnp.bfloat16)

    # --- pass 2: relu -> BN -> conv -> residual, tiled over (batch, L) --------
    main_kernel = functools.partial(_main_kernel, l_tile=l_tile, true_l=true_l)
    out = pl.pallas_call(
        main_kernel,
        out_shape=jax.ShapeDtypeStruct((n, C, true_l), x.dtype),
        grid_spec=pltpu.PrefetchScalarGridSpec(
            num_scalar_prefetch=0,
            grid=(n, l_tiles),
            in_specs=[
                pl.BlockSpec((1, C, l_tile), lambda i, j: (i, 0, j)),
                # All edge columns of one batch, resident across the L axis.
                # TODO(synk): for very long L this block (padded to 128 lanes per
                # tile in VMEM) should be re-chunked; it is tiny at realistic L.
                pl.BlockSpec((1, l_tiles, C, 2 * PAD), lambda i, j: (i, 0, 0, 0)),
                pl.BlockSpec((C, 1), lambda i, j: (0, 0)),
                pl.BlockSpec((C, 1), lambda i, j: (0, 0)),
                pl.BlockSpec((C, K * C), lambda i, j: (0, 0)),
            ],
            out_specs=pl.BlockSpec((1, C, l_tile), lambda i, j: (i, 0, j)),
        ),
        compiler_params=pltpu.CompilerParams(
            dimension_semantics=("parallel", "parallel"),
            vmem_limit_bytes=32 * 1024 * 1024),
        cost_estimate=pl.CostEstimate(
            flops=2 * K * C * C * n * true_l + 6 * n * C * true_l,
            transcendentals=0,
            bytes_accessed=2 * n * C * true_l * 4
            + n * l_tiles * C * 2 * PAD * 4 + C * K * C * 2 + 2 * C * 4),
    )(x, edges, scale, shift, w_folded)

    return out


def reference(x, w_oik, gamma, beta):
    """Pure-JAX f32 reference mirroring the PyTorch forward."""
    h = jnp.maximum(x, 0.0)
    mean = jnp.mean(h, axis=(0, 2), keepdims=True)
    var = jnp.mean((h - mean) ** 2, axis=(0, 2), keepdims=True)
    h = (h - mean) * lax.rsqrt(var + EPS)
    h = h * gamma.reshape(1, -1, 1) + beta.reshape(1, -1, 1)
    out = lax.conv_general_dilated(
        h, w_oik, window_strides=(1,), padding=[(PAD, PAD)],
        dimension_numbers=("NCH", "OIH", "NCH"))
    return out + x


if __name__ == "__main__":
    key = jax.random.PRNGKey(0)
    kx, kw, kg, kb = jax.random.split(key, 4)

    # Small demo: 3 L-tiles at the default l_tile=1024 with a ragged last tile,
    # so the halo paths (both directions) and the masked tail are exercised.
    N, L = 2, 2176
    x = jax.random.normal(kx, (N, C, L), dtype=jnp.float32)

    # Conv1d weight, PyTorch shape (C_out, C_in, K), kaiming_normal_(fan_out, relu).
    std = (2.0 / (C * K)) ** 0.5
    w_oik = std * jax.random.normal(kw, (C, C, K), dtype=jnp.float32)

    # BatchNorm affine params (perturbed from the default 1/0 init to exercise
    # the affine path).
    gamma = 1.0 + 0.1 * jax.random.normal(kg, (C,), dtype=jnp.float32)
    beta = 0.1 * jax.random.normal(kb, (C,), dtype=jnp.float32)

    out = residual_block(x, w_oik, gamma, beta)
    out = jax.block_until_ready(out)

    ref = reference(x, w_oik, gamma, beta)
    assert out.shape == (N, C, L)
    # Tolerance loosened vs. pure f32: conv operands are bf16 on the MXU.
    err = float(jnp.max(jnp.abs(out - ref)))
    assert jnp.allclose(out, ref, rtol=3e-2, atol=3e-2), f"mismatch vs reference (max abs err {err})"

    print("KERNEL_OK")
</pallas_src>

<mosaic_0001>
module attributes {stable_mosaic.version = 11 : i64} {
  func.func @_stats_kernel(%arg0: i32, %arg1: i32, %arg2: memref<1x80x1024xf32, #tpu.memory_space<vmem>>, %arg3: memref<1x80x2xf32, #tpu.memory_space<vmem>>, %arg4: memref<1x1x80x4xf32, #tpu.memory_space<vmem>>) attributes {dimension_semantics = [#tpu.dimension_semantics<parallel>, #tpu.dimension_semantics<arbitrary>], iteration_bounds = array<i64: 2, 3>, scalar_prefetch = 0 : i64, scratch_operands = 0 : i64, tpu.core_type = #tpu.core_type<tc>, window_params = [{transform_indices = @transform_0, window_bounds = array<i64: 1, 80, 1024>}, {transform_indices = @transform_1, window_bounds = array<i64: 1, 80, 2>}, {transform_indices = @transform_2, window_bounds = array<i64: 1, 1, 80, 4>}]} {
    %c0_i32 = arith.constant 0 : i32
    %0 = arith.cmpi eq, %arg1, %c0_i32 : i32
    %1 = arith.extui %0 : i1 to i32
    %c0_i32_0 = arith.constant 0 : i32
    %2 = arith.cmpi ne, %1, %c0_i32_0 : i32
    scf.if %2 {
      %cst_16 = arith.constant 0.000000e+00 : f32
      %35 = vector.broadcast %cst_16 : f32 to vector<1x80x2xf32>
      %c0_17 = arith.constant 0 : index
      %c0_18 = arith.constant 0 : index
      %c0_19 = arith.constant 0 : index
      %36 = vector.load %arg3[%c0_17, %c0_18, %c0_19] : memref<1x80x2xf32, #tpu.memory_space<vmem>>, vector<1x80x2xf32>
      tpu.vector_store %arg3[%c0_17, %c0_18, %c0_19], %35 {strides = array<i32>} : memref<1x80x2xf32, #tpu.memory_space<vmem>>, vector<1x80x2xf32>,
    } else {
    }
    %c0 = arith.constant 0 : index
    %c0_1 = arith.constant 0 : index
    %c0_2 = arith.constant 0 : index
    %3 = vector.load %arg2[%c0, %c0_1, %c0_2] : memref<1x80x1024xf32, #tpu.memory_space<vmem>>, vector<1x80x1024xf32>
    %4 = vector.shape_cast %3 : vector<1x80x1024xf32> to vector<80x1024xf32>
    %c1024_i32 = arith.constant 1024 : i32
    %5 = arith.muli %arg1, %c1024_i32 : i32
    %6 = tpu.iota {dimensions = array<i32: 1>} : vector<1x1024xi32>
    %7 = vector.broadcast %5 : i32 to vector<1x1024xi32>
    %8 = arith.addi %7, %6 : vector<1x1024xi32>
    %c2176_i32 = arith.constant 2176 : i32
    %9 = vector.broadcast %c2176_i32 : i32 to vector<1x1024xi32>
    %10 = arith.cmpi slt, %8, %9 : vector<1x1024xi32>
    %cst = arith.constant 0.000000e+00 : f32
    %11 = vector.broadcast %cst : f32 to vector<80x1024xf32>
    %12 = arith.maximumf %4, %11 : vector<80x1024xf32>
    %cst_3 = arith.constant 0.000000e+00 : f32
    %13 = vector.shape_cast %10 : vector<1x1024xi1> to vector<1x1024xi1>
    %14 = vector.broadcast %13 : vector<1x1024xi1> to vector<80x1024xi1>
    %15 = vector.broadcast %cst_3 : f32 to vector<80x1024xf32>
    %16 = arith.select %14, %12, %15 : vector<80x1024xi1>, vector<80x1024xf32>
    %cst_4 = arith.constant dense<0.000000e+00> : vector<80xf32>
    %17 = vector.multi_reduction <add>, %16, %cst_4 [1] : vector<80x1024xf32> to vector<80xf32>
    %18 = vector.shape_cast %17 : vector<80xf32> to vector<80x1xf32>
    %19 = arith.mulf %16, %16 : vector<80x1024xf32>
    %cst_5 = arith.constant dense<0.000000e+00> : vector<80xf32>
    %20 = vector.multi_reduction <add>, %19, %cst_5 [1] : vector<80x1024xf32> to vector<80xf32>
    %21 = vector.shape_cast %20 : vector<80xf32> to vector<80x1xf32>
    %c0_6 = arith.constant 0 : index
    %c0_7 = arith.constant 0 : index
    %c0_8 = arith.constant 0 : index
    %22 = vector.load %arg3[%c0_6, %c0_7, %c0_8] : memref<1x80x2xf32, #tpu.memory_space<vmem>>, vector<1x80x2xf32>
    %23 = vector.shape_cast %22 : vector<1x80x2xf32> to vector<80x2xf32>
    %24 = tpu.concatenate %18, %21 in 1 : vector<80x1xf32>, vector<80x1xf32> -> vector<80x2xf32>
    %25 = arith.addf %23, %24 : vector<80x2xf32>
    %c0_9 = arith.constant 0 : index
    %c0_10 = arith.constant 0 : index
    %c0_11 = arith.constant 0 : index
    %26 = vector.load %arg3[%c0_9, %c0_10, %c0_11] : memref<1x80x2xf32, #tpu.memory_space<vmem>>, vector<1x80x2xf32>
    %27 = vector.shape_cast %26 : vector<1x80x2xf32> to vector<80x2xf32>
    %28 = vector.shape_cast %25 : vector<80x2xf32> to vector<1x80x2xf32>
    tpu.vector_store %arg3[%c0_9, %c0_10, %c0_11], %28 {strides = array<i32>} : memref<1x80x2xf32, #tpu.memory_space<vmem>>, vector<1x80x2xf32>,
    %29 = vector.extract_strided_slice %4 {offsets = [0, 0], sizes = [80, 2], strides = [1, 1]} : vector<80x1024xf32> to vector<80x2xf32>
    %30 = vector.extract_strided_slice %4 {offsets = [0, 1022], sizes = [80, 2], strides = [1, 1]} : vector<80x1024xf32> to vector<80x2xf32>
    %31 = tpu.concatenate %29, %30 in 1 : vector<80x2xf32>, vector<80x2xf32> -> vector<80x4xf32>
    %c0_12 = arith.constant 0 : index
    %c0_13 = arith.constant 0 : index
    %c0_14 = arith.constant 0 : index
    %c0_15 = arith.constant 0 : index
    %32 = vector.load %arg4[%c0_12, %c0_13, %c0_14, %c0_15] : memref<1x1x80x4xf32, #tpu.memory_space<vmem>>, vector<1x1x80x4xf32>
    %33 = vector.shape_cast %32 : vector<1x1x80x4xf32> to vector<80x4xf32>
    %34 = vector.shape_cast %31 : vector<80x4xf32> to vector<1x1x80x4xf32>
    tpu.vector_store %arg4[%c0_12, %c0_13, %c0_14, %c0_15], %34 {strides = array<i32>} : memref<1x1x80x4xf32, #tpu.memory_space<vmem>>, vector<1x1x80x4xf32>,
    return
  }
  func.func @transform_0(%arg0: i32, %arg1: i32) -> (i32, i32, i32) {
    %c0_i32 = arith.constant 0 : i32
    %c0_i32_0 = arith.constant 0 : i32
    return %arg0, %c0_i32, %arg1 : i32, i32, i32
  }
  func.func @transform_1(%arg0: i32, %arg1: i32) -> (i32, i32, i32) {
    %c0_i32 = arith.constant 0 : i32
    %c0_i32_0 = arith.constant 0 : i32
    %c0_i32_1 = arith.constant 0 : i32
    return %arg0, %c0_i32, %c0_i32_0 : i32, i32, i32
  }
  func.func @transform_2(%arg0: i32, %arg1: i32) -> (i32, i32, i32, i32) {
    %c0_i32 = arith.constant 0 : i32
    %c0_i32_0 = arith.constant 0 : i32
    %c0_i32_1 = arith.constant 0 : i32
    return %arg0, %arg1, %c0_i32, %c0_i32_0 : i32, i32, i32, i32
  }
}

</mosaic_0001>

<llo_original>
// kernel: tpu_custom_call.1
$region0: #{tpu_custom_call.1}
  #allocation0 [shape = 'u32[]', space=smem, size = 0x4, offset = 0x4, fixed_abs, tag = 'smem constant byte address 0x4 - core index']
  #allocation1 [shape = 'u32[144,128]{1,0:T(1,128)}', space=vmem, size = 0x12000, scoped, tag = 'internal scratch']
  %s0 = inlined_call_operand.hbm [shape: f32[2,80,2176], index: 0, kind: input, shape index: {}]
  %s1 = inlined_call_operand.vmem [shape: f32[2,80,2], index: 1, kind: output, shape index: {0}]
  %s2 = inlined_call_operand.vmem [shape: f32[2,3,80,4], index: 2, kind: output, shape index: {1}]
  %3 = xla_tuple %s1, %s2
  %s4 = sld [smem:[#allocation0]]
  $region53: #{tpu_custom_call.1} parent=0
    _
  %s6 = ssub.s32 1, %s4
  %s7 = scalar_select 0, %s6, %s4
  $region1: #{tpu_custom_call.1} parent=0
    #allocation2 [shape = 'u8[655360]{0}', space=vmem, size = 0xa0000, scoped, tag = 'input window, operand 0']
    #allocation3 [shape = 's32[2]{0}', space=sflag, size = 0x8, scoped, tag = 'scoped memory for tpu_custom_call.1']
    %8 = vsyncpa [#allocation3], 0
    %s9 = scalar_lea.sflag [#allocation3], 1
    %10 = vsyncpa %s9, 0
    loop: start=0, step=1, limit=8
    $region2: #{tpu_custom_call.1} parent=1 // loop_pre_header
      _
    $region3: #{tpu_custom_call.1} parent=1 // loop_header
      %s12 = sphi 0, %s16
      %p13 = scmp.ge.s32.totalorder %s12, 8
      %s19 = sphi 0, %s31
      %s20 = sphi 0, %s27
      %s21 = sphi 0, %s19
      %s22 = sphi 0, %s20
      %s23 = sphi 0, %s21
      %s24 = sphi 0, %s22
      %s36 = sphi 0, %s38
      %s39 = sphi 0, %s36
      %s40 = sphi 0, %s39
      %s56 = sphi 0, %s40
      %s62 = sphi 0, %s64
      %s65 = sphi 0, %s62
      %s66 = sphi 0, %s65
      %s82 = sphi 0, %s66
      %s90 = sphi 0, %s92
      %s93 = sphi 0, %s90
      %s94 = sphi 0, %s93
      %s110 = sphi 0, %s94
    $region4: #{tpu_custom_call.1} parent=1 // loop_header_branch
      %15 = sbr.rel (%p13) target = $region8
    $region5: #{tpu_custom_call.1} parent=1 // loop_body
      %s17 = ssub.s32 %s12, 1
      %s18 = ssub.s32 %s12, 2
      %s25 = sadd.s32 1, %s20
      %p26 = scmp.ge.s32.totalorder %s25, 3
      %s27 = scalar_select %p26, 0, %s25
      %s28 = sadd.s32 1, %s19
      %s29 = scalar_select %p26, %s28, %s19
      %p30 = scmp.ge.s32.totalorder %s29, 2
      %s31 = scalar_select %p30, 0, %s29
      %s32 = ssub.s32 %s19, %s31
      %s33 = ssub.s32 %s20, %s27
      %s34 = sor.u32 %s32, %s33
      %p35 = scmp.eq.s32.totalorder %s34, 0
      %s37 = sadd.s32 %s36, 1
      %s38 = scalar_select %p35, %s36, %s37
      %p41 = pneg %p35
      %p42 = scmp.eq.s32.totalorder %s12, 5
      %p43 = por %p41, %p42
      %p44 = scmp.ne.s32.totalorder %s36, %s39
      %p45 = scmp.eq.s32.totalorder %s12, 0
      %p46 = por %p44, %p45
      %p47 = scmp.ne.s32.totalorder %s36, %s39
      %p48 = scmp.eq.s32.totalorder %s17, 5
      %p49 = por %p47, %p48
      %p50 = scmp.ne.s32.totalorder %s39, %s40
      %p51 = scmp.eq.s32.totalorder %s17, 0
      %p52 = por %p50, %p51
      %p53 = scmp.ne.s32.totalorder %s39, %s40
      %p54 = scmp.eq.s32.totalorder %s18, 5
      %p55 = por %p53, %p54
      %p57 = scmp.ne.s32.totalorder %s40, %s56
      %p58 = scmp.eq.s32.totalorder %s18, 0
      %p59 = por %p57, %p58
      %s60 = ssub.s32 %s19, %s31
      %p61 = scmp.eq.s32.totalorder %s60, 0
      %s63 = sadd.s32 %s62, 1
      %s64 = scalar_select %p61, %s62, %s63
      %p67 = pneg %p61
      %p68 = scmp.eq.s32.totalorder %s12, 5
      %p69 = por %p67, %p68
      %p70 = scmp.ne.s32.totalorder %s62, %s65
      %p71 = scmp.eq.s32.totalorder %s12, 0
      %p72 = por %p70, %p71
      %p73 = scmp.ne.s32.totalorder %s62, %s65
      %p74 = scmp.eq.s32.totalorder %s17, 5
      %p75 = por %p73, %p74
      %p76 = scmp.ne.s32.totalorder %s65, %s66
      %p77 = scmp.eq.s32.totalorder %s17, 0
      %p78 = por %p76, %p77
      %p79 = scmp.ne.s32.totalorder %s65, %s66
      %p80 = scmp.eq.s32.totalorder %s18, 5
      %p81 = por %p79, %p80
      %p83 = scmp.ne.s32.totalorder %s66, %s82
      %p84 = scmp.eq.s32.totalorder %s18, 0
      %p85 = por %p83, %p84
      %s86 = ssub.s32 %s19, %s31
      %s87 = ssub.s32 %s20, %s27
      %s88 = sor.u32 %s86, %s87
      %p89 = scmp.eq.s32.totalorder %s88, 0
      %s91 = sadd.s32 %s90, 1
      %s92 = scalar_select %p89, %s90, %s91
      %p95 = pneg %p89
      %p96 = scmp.eq.s32.totalorder %s12, 5
      %p97 = por %p95, %p96
      %p98 = scmp.ne.s32.totalorder %s90, %s93
      %p99 = scmp.eq.s32.totalorder %s12, 0
      %p100 = por %p98, %p99
      %p101 = scmp.ne.s32.totalorder %s90, %s93
      %p102 = scmp.eq.s32.totalorder %s17, 5
      %p103 = por %p101, %p102
      %p104 = scmp.ne.s32.totalorder %s93, %s94
      %p105 = scmp.eq.s32.totalorder %s17, 0
      %p106 = por %p104, %p105
      %p107 = scmp.ne.s32.totalorder %s93, %s94
      %p108 = scmp.eq.s32.totalorder %s18, 5
      %p109 = por %p107, %p108
      %p111 = scmp.ne.s32.totalorder %s94, %s110
      %p112 = scmp.eq.s32.totalorder %s18, 0
      %p113 = por %p111, %p112
      %p114 = scmp.le.s32.totalorder 1, %s12
      %p115 = scmp.lt.s32.totalorder %s12, 7
      %p116 = pnand %p114, %p115
      %p117 = pneg %p116
      // Predicated region
      $region9: #{tpu_custom_call.1} parent=5 // pred_check
        _
      $region10: #{tpu_custom_call.1} parent=5 // pred_check_branch
        %119 = sbr.rel (%p116) target = $region12
      $region11: #{tpu_custom_call.1} parent=5 // pred_region
        %s120 = ssub.s32 %s12, 1
      $region12: #{tpu_custom_call.1} parent=5 // pred_fallthru
        _
      %p121 = scmp.lt.s32.totalorder %s12, 6
      // Predicated region
      $region13: #{tpu_custom_call.1} parent=5 // pred_check
        %p122 = pneg %p121
      $region14: #{tpu_custom_call.1} parent=5 // pred_check_branch
        %124 = sbr.rel (%p122) target = $region16
      $region15: #{tpu_custom_call.1} parent=5 // pred_region
        // Predicated region
        $region17: #{tpu_custom_call.1} parent=15 // pred_check
          %p125 = pneg %p46
        $region18: #{tpu_custom_call.1} parent=15 // pred_check_branch
          %127 = sbr.rel (%p125) target = $region20
        $region19: #{tpu_custom_call.1} parent=15 // pred_region
          %s128 = sand.u32 %s36, 1
          %s129 = scalar_lea.sflag [#allocation3], %s128
          %s130 = sand.u32 %s36, 1
          %s131 = smul.addr %s130, 640
          %s132 = scalar_lea.vmem [#allocation2], %s131
          %s133 = smul.u32 8, %s20
          %s134 = ssub.s32 17, %s133
          %p135 = scmp.lt.s32.totalorder %s134, 8
          %s136 = scalar_select %p135, %s134, 8
          %s137 = smul.u32 1280, %s136
          %s139 = ssub.s32 10240, %s137
          %140 = vsyncadd %s129, %s139
          %p141 = scmp.ne.s32.totalorder 0, %s137
          %s142 = smul.addr %s19, 170
          %s143 = sadd.s32 %s133, %s142
          %s144 = smul.addr %s143, 128
          %s145 = scalar_lea.hbm %s0, %s144
          %s146 = smul.u32 %s136, 8
          %s147 = smul.u32 %s146, 10
          %s148 = sshll.u32 %s132, 4
          %s149 = int_to_ptr.vmem [resolvable:$true] %s148
          %s150 = sshll.u32 %s147, 4
          %154 = dma.hbm_to_vmem [thread:$0]  (%p141), %s145, %s150, %s149, %s129, 2176, 1024, %s146
        $region20: #{tpu_custom_call.1} parent=15 // pred_fallthru
          _
      $region16: #{tpu_custom_call.1} parent=5 // pred_fallthru
        _
      %p155 = scmp.le.s32.totalorder 1, %s12
      %p156 = scmp.lt.s32.totalorder %s12, 7
      %p157 = pnand %p155, %p156
      %p158 = pneg %p157
      // Predicated region
      $region21: #{tpu_custom_call.1} parent=5 // pred_check
        _
      $region22: #{tpu_custom_call.1} parent=5 // pred_check_branch
        %160 = sbr.rel (%p157) target = $region24
      $region23: #{tpu_custom_call.1} parent=5 // pred_region
        %s161 = ssub.s32 %s12, 1
        %s162 = sand.u32 %s39, 1
        %s163 = scalar_lea.sflag [#allocation3], %s162
        %s164 = sand.u32 %s39, 1
        %s165 = smul.addr %s164, 640
        %s166 = scalar_lea.vmem [#allocation2], %s165
        // Predicated region
        $region25: #{tpu_custom_call.1} parent=23 // pred_check
          %p167 = pneg %p52
        $region26: #{tpu_custom_call.1} parent=23 // pred_check_branch
          %169 = sbr.rel (%p167) target = $region28
        $region27: #{tpu_custom_call.1} parent=23 // pred_region
          %170 = dma.done %s163, 10240
        $region28: #{tpu_custom_call.1} parent=23 // pred_fallthru
          _
        %s171 = sand.u32 %s39, 1
        %s172 = scalar_lea.sflag [#allocation3], %s171
        %s173 = sand.u32 %s39, 1
        %s174 = smul.addr %s173, 640
        %s175 = scalar_lea.vmem [#allocation2], %s174
        %p176 = pneg %p52
        %p177 = pneg %p49
        %p178 = pneg %p78
        %p179 = pneg %p75
        %p180 = scmp.lt.s32.totalorder %s21, 1
        %s181 = scalar_select %p180, %s21, 1
        %s182 = smul.addr %s181, 10
        %s183 = smul.addr %s182, 8
        %s184 = scalar_lea.vmem %s1, %s183
        %p185 = pneg %p106
        %p186 = pneg %p103
        %p187 = scmp.lt.s32.totalorder %s21, 1
        %s188 = scalar_select %p187, %s21, 1
        %p189 = scmp.lt.s32.totalorder %s22, 2
        %s190 = scalar_select %p189, %s22, 2
        %s191 = smul.addr %s190, 10
        %s192 = smul.addr %s188, 30
        %s193 = sadd.s32 %s191, %s192
        %s194 = smul.addr %s193, 8
        %s195 = scalar_lea.vmem %s2, %s194
        %s196 = smul.u32 8, %s22
        %s197 = ssub.s32 17, %s196
        %p198 = scmp.lt.s32.totalorder %s197, 8
        %s199 = scalar_select %p198, %s197, 8
        %s200 = smul.u32 1280, %s199
        %p201 = scmp.lt.s32.totalorder %s21, 1
        %s202 = scalar_select %p201, %s21, 1
        %s203 = smul.addr %s202, 10
        %s204 = smul.addr %s203, 8
        %s205 = scalar_lea.vmem %s1, %s204
        %p206 = scmp.lt.s32.totalorder %s21, 1
        %s207 = scalar_select %p206, %s21, 1
        %p208 = scmp.lt.s32.totalorder %s22, 2
        %s209 = scalar_select %p208, %s22, 2
        %s210 = smul.addr %s209, 10
        %s211 = smul.addr %s207, 30
        %s212 = sadd.s32 %s210, %s211
        %s213 = smul.addr %s212, 8
        %s214 = scalar_lea.vmem %s2, %s213
        %p215 = scmp.eq.s32.totalorder %s22, 0
        // Predicated region
        $region29: #{tpu_custom_call.1} parent=23 // pred_check
          %p216 = pneg %p215
        $region30: #{tpu_custom_call.1} parent=23 // pred_check_branch
          %218 = sbr.rel (%p216) target = $region32
        $region31: #{tpu_custom_call.1} parent=23 // pred_region
          %vm219 = vcmask 15360
          %220 = vst.msk [vmem:[%s205] sm:$0xff] %vm219, 0.0
          %221 = vst.msk [vmem:[%s205 + $0x8] sm:$0xff] %vm219, 0.0
          %222 = vst.msk [vmem:[%s205 + $0x10] sm:$0xff] %vm219, 0.0
          %223 = vst.msk [vmem:[%s205 + $0x18] sm:$0xff] %vm219, 0.0
          %224 = vst.msk [vmem:[%s205 + $0x20] sm:$0xff] %vm219, 0.0
          %225 = vst.msk [vmem:[%s205 + $0x28] sm:$0xff] %vm219, 0.0
          %226 = vst.msk [vmem:[%s205 + $0x30] sm:$0xff] %vm219, 0.0
          %227 = vst.msk [vmem:[%s205 + $0x38] sm:$0xff] %vm219, 0.0
          %228 = vst.msk [vmem:[%s205 + $0x40] sm:$0xff] %vm219, 0.0
          %229 = vst.msk [vmem:[%s205 + $0x48] sm:$0xff] %vm219, 0.0
        $region32: #{tpu_custom_call.1} parent=23 // pred_fallthru
          _
        %v230 = vld [vmem:[%s166] sm:$0xff]
        %v231 = vld [vmem:[%s166 + $0x8] sm:$0xff]
        %v232 = vld [vmem:[%s166 + $0x10] sm:$0xff]
        %v233 = vld [vmem:[%s166 + $0x18] sm:$0xff]
        %v234 = vld [vmem:[%s166 + $0x20] sm:$0xff]
        %v235 = vld [vmem:[%s166 + $0x28] sm:$0xff]
        %v236 = vld [vmem:[%s166 + $0x30] sm:$0xff]
        %v237 = vld [vmem:[%s166 + $0x38] sm:$0xff]
        %v238 = vld [vmem:[%s166 + $0x40] sm:$0xff]
        %v239 = vld [vmem:[%s166 + $0x48] sm:$0xff]
        %v240 = vld [vmem:[%s166 + $0x50] sm:$0xff]
        %v241 = vld [vmem:[%s166 + $0x58] sm:$0xff]
        %v242 = vld [vmem:[%s166 + $0x60] sm:$0xff]
        %v243 = vld [vmem:[%s166 + $0x68] sm:$0xff]
        %v244 = vld [vmem:[%s166 + $0x70] sm:$0xff]
        %v245 = vld [vmem:[%s166 + $0x78] sm:$0xff]
        %v246 = vld [vmem:[%s166 + $0x80] sm:$0xff]
        %v247 = vld [vmem:[%s166 + $0x88] sm:$0xff]
        %v248 = vld [vmem:[%s166 + $0x90] sm:$0xff]
        %v249 = vld [vmem:[%s166 + $0x98] sm:$0xff]
        %v250 = vld [vmem:[%s166 + $0xa0] sm:$0xff]
        %v251 = vld [vmem:[%s166 + $0xa8] sm:$0xff]
        %v252 = vld [vmem:[%s166 + $0xb0] sm:$0xff]
        %v253 = vld [vmem:[%s166 + $0xb8] sm:$0xff]
        %v254 = vld [vmem:[%s166 + $0xc0] sm:$0xff]
        %v255 = vld [vmem:[%s166 + $0xc8] sm:$0xff]
        %v256 = vld [vmem:[%s166 + $0xd0] sm:$0xff]
        %v257 = vld [vmem:[%s166 + $0xd8] sm:$0xff]
        %v258 = vld [vmem:[%s166 + $0xe0] sm:$0xff]
        %v259 = vld [vmem:[%s166 + $0xe8] sm:$0xff]
        %v260 = vld [vmem:[%s166 + $0xf0] sm:$0xff]
        %v261 = vld [vmem:[%s166 + $0xf8] sm:$0xff]
        %v262 = vld [vmem:[%s166 + $0x100] sm:$0xff]
        %v263 = vld [vmem:[%s166 + $0x108] sm:$0xff]
        %v264 = vld [vmem:[%s166 + $0x110] sm:$0xff]
        %v265 = vld [vmem:[%s166 + $0x118] sm:$0xff]
        %v266 = vld [vmem:[%s166 + $0x120] sm:$0xff]
        %v267 = vld [vmem:[%s166 + $0x128] sm:$0xff]
        %v268 = vld [vmem:[%s166 + $0x130] sm:$0xff]
        %v269 = vld [vmem:[%s166 + $0x138] sm:$0xff]
        %v270 = vld [vmem:[%s166 + $0x140] sm:$0xff]
        %v271 = vld [vmem:[%s166 + $0x148] sm:$0xff]
        %v272 = vld [vmem:[%s166 + $0x150] sm:$0xff]
        %v273 = vld [vmem:[%s166 + $0x158] sm:$0xff]
        %v274 = vld [vmem:[%s166 + $0x160] sm:$0xff]
        %v275 = vld [vmem:[%s166 + $0x168] sm:$0xff]
        %v276 = vld [vmem:[%s166 + $0x170] sm:$0xff]
        %v277 = vld [vmem:[%s166 + $0x178] sm:$0xff]
        %v278 = vld [vmem:[%s166 + $0x180] sm:$0xff]
        %v279 = vld [vmem:[%s166 + $0x188] sm:$0xff]
        %v280 = vld [vmem:[%s166 + $0x190] sm:$0xff]
        %v281 = vld [vmem:[%s166 + $0x198] sm:$0xff]
        %v282 = vld [vmem:[%s166 + $0x1a0] sm:$0xff]
        %v283 = vld [vmem:[%s166 + $0x1a8] sm:$0xff]
        %v284 = vld [vmem:[%s166 + $0x1b0] sm:$0xff]
        %v285 = vld [vmem:[%s166 + $0x1b8] sm:$0xff]
        %v286 = vld [vmem:[%s166 + $0x1c0] sm:$0xff]
        %v287 = vld [vmem:[%s166 + $0x1c8] sm:$0xff]
        %v288 = vld [vmem:[%s166 + $0x1d0] sm:$0xff]
        %v289 = vld [vmem:[%s166 + $0x1d8] sm:$0xff]
        %v290 = vld [vmem:[%s166 + $0x1e0] sm:$0xff]
        %v291 = vld [vmem:[%s166 + $0x1e8] sm:$0xff]
        %v292 = vld [vmem:[%s166 + $0x1f0] sm:$0xff]
        %v293 = vld [vmem:[%s166 + $0x1f8] sm:$0xff]
        %v294 = vld [vmem:[%s166 + $0x200] sm:$0xff]
        %v295 = vld [vmem:[%s166 + $0x208] sm:$0xff]
        %v296 = vld [vmem:[%s166 + $0x210] sm:$0xff]
        %v297 = vld [vmem:[%s166 + $0x218] sm:$0xff]
        %v298 = vld [vmem:[%s166 + $0x220] sm:$0xff]
        %v299 = vld [vmem:[%s166 + $0x228] sm:$0xff]
        %v300 = vld [vmem:[%s166 + $0x230] sm:$0xff]
        %v301 = vld [vmem:[%s166 + $0x238] sm:$0xff]
        %v302 = vld [vmem:[%s166 + $0x240] sm:$0xff]
        %v303 = vld [vmem:[%s166 + $0x248] sm:$0xff]
        %v304 = vld [vmem:[%s166 + $0x250] sm:$0xff]
        %v305 = vld [vmem:[%s166 + $0x258] sm:$0xff]
        %v306 = vld [vmem:[%s166 + $0x260] sm:$0xff]
        %v307 = vld [vmem:[%s166 + $0x268] sm:$0xff]
        %v308 = vld [vmem:[%s166 + $0x270] sm:$0xff]
        %v309 = vld [vmem:[%s166 + $0x278] sm:$0xff]
        %s310 = smul.u32 %s22, 1024
        %v311 = vlaneseq
        %v312 = vand.u32 %v311, 127
        %v313 = vadd.s32 %v312, 128
        %v314 = vadd.s32 %v312, 256
        %v315 = vadd.s32 %v312, 384
        %v316 = vadd.s32 %v312, 512
        %v317 = vadd.s32 %v312, 640
        %v318 = vadd.s32 %v312, 768
        %v319 = vadd.s32 %v312, 896
        %v320 = vstv %s310
        %v321 = vadd.s32 %v320, %v312
        %v322 = vadd.s32 %v320, %v313
        %v323 = vadd.s32 %v320, %v314
        %v324 = vadd.s32 %v320, %v315
        %v325 = vadd.s32 %v320, %v316
        %v326 = vadd.s32 %v320, %v317
        %v327 = vadd.s32 %v320, %v318
        %v328 = vadd.s32 %v320, %v319
        %vm329 = vcmp.lt.s32.totalorder %v321, 2176
        %vm330 = vcmp.lt.s32.totalorder %v322, 2176
        %vm331 = vcmp.lt.s32.totalorder %v323, 2176
        %vm332 = vcmp.lt.s32.totalorder %v324, 2176
        %vm333 = vcmp.lt.s32.totalorder %v325, 2176
        %vm334 = vcmp.lt.s32.totalorder %v326, 2176
        %vm335 = vcmp.lt.s32.totalorder %v327, 2176
        %vm336 = vcmp.lt.s32.totalorder %v328, 2176
        %v337 = vmax.f32 %v230, 0.0
        %v338 = vmax.f32 %v231, 0.0
        %v339 = vmax.f32 %v232, 0.0
        %v340 = vmax.f32 %v233, 0.0
        %v341 = vmax.f32 %v234, 0.0
        %v342 = vmax.f32 %v235, 0.0
        %v343 = vmax.f32 %v236, 0.0
        %v344 = vmax.f32 %v237, 0.0
        %v345 = vmax.f32 %v238, 0.0
        %v346 = vmax.f32 %v239, 0.0
        %v347 = vmax.f32 %v240, 0.0
        %v348 = vmax.f32 %v241, 0.0
        %v349 = vmax.f32 %v242, 0.0
        %v350 = vmax.f32 %v243, 0.0
        %v351 = vmax.f32 %v244, 0.0
        %v352 = vmax.f32 %v245, 0.0
        %v353 = vmax.f32 %v246, 0.0
        %v354 = vmax.f32 %v247, 0.0
        %v355 = vmax.f32 %v248, 0.0
        %v356 = vmax.f32 %v249, 0.0
        %v357 = vmax.f32 %v250, 0.0
        %v358 = vmax.f32 %v251, 0.0
        %v359 = vmax.f32 %v252, 0.0
        %v360 = vmax.f32 %v253, 0.0
        %v361 = vmax.f32 %v254, 0.0
        %v362 = vmax.f32 %v255, 0.0
        %v363 = vmax.f32 %v256, 0.0
        %v364 = vmax.f32 %v257, 0.0
        %v365 = vmax.f32 %v258, 0.0
        %v366 = vmax.f32 %v259, 0.0
        %v367 = vmax.f32 %v260, 0.0
        %v368 = vmax.f32 %v261, 0.0
        %v369 = vmax.f32 %v262, 0.0
        %v370 = vmax.f32 %v263, 0.0
        %v371 = vmax.f32 %v264, 0.0
        %v372 = vmax.f32 %v265, 0.0
        %v373 = vmax.f32 %v266, 0.0
        %v374 = vmax.f32 %v267, 0.0
        %v375 = vmax.f32 %v268, 0.0
        %v376 = vmax.f32 %v269, 0.0
        %v377 = vmax.f32 %v270, 0.0
        %v378 = vmax.f32 %v271, 0.0
        %v379 = vmax.f32 %v272, 0.0
        %v380 = vmax.f32 %v273, 0.0
        %v381 = vmax.f32 %v274, 0.0
        %v382 = vmax.f32 %v275, 0.0
        %v383 = vmax.f32 %v276, 0.0
        %v384 = vmax.f32 %v277, 0.0
        %v385 = vmax.f32 %v278, 0.0
        %v386 = vmax.f32 %v279, 0.0
        %v387 = vmax.f32 %v280, 0.0
        %v388 = vmax.f32 %v281, 0.0
        %v389 = vmax.f32 %v282, 0.0
        %v390 = vmax.f32 %v283, 0.0
        %v391 = vmax.f32 %v284, 0.0
        %v392 = vmax.f32 %v285, 0.0
        %v393 = vmax.f32 %v286, 0.0
        %v394 = vmax.f32 %v287, 0.0
        %v395 = vmax.f32 %v288, 0.0
        %v396 = vmax.f32 %v289, 0.0
        %v397 = vmax.f32 %v290, 0.0
        %v398 = vmax.f32 %v291, 0.0
        %v399 = vmax.f32 %v292, 0.0
        %v400 = vmax.f32 %v293, 0.0
        %v401 = vmax.f32 %v294, 0.0
        %v402 = vmax.f32 %v295, 0.0
        %v403 = vmax.f32 %v296, 0.0
        %v404 = vmax.f32 %v297, 0.0
        %v405 = vmax.f32 %v298, 0.0
        %v406 = vmax.f32 %v299, 0.0
        %v407 = vmax.f32 %v300, 0.0
        %v408 = vmax.f32 %v301, 0.0
        %v409 = vmax.f32 %v302, 0.0
        %v410 = vmax.f32 %v303, 0.0
        %v411 = vmax.f32 %v304, 0.0
        %v412 = vmax.f32 %v305, 0.0
        %v413 = vmax.f32 %v306, 0.0
        %v414 = vmax.f32 %v307, 0.0
        %v415 = vmax.f32 %v308, 0.0
        %v416 = vmax.f32 %v309, 0.0
        %v417 = vsel %vm329, 1, 0
        %v418 = vsel %vm330, 1, 0
        %v419 = vsel %vm331, 1, 0
        %v420 = vsel %vm332, 1, 0
        %v421 = vsel %vm333, 1, 0
        %v422 = vsel %vm334, 1, 0
        %v423 = vsel %vm335, 1, 0
        %v424 = vsel %vm336, 1, 0
        %vm425 = vcmp.eq.s32.totalorder %v417, 1
        %vm426 = vcmp.eq.s32.totalorder %v418, 1
        %vm427 = vcmp.eq.s32.totalorder %v419, 1
        %vm428 = vcmp.eq.s32.totalorder %v420, 1
        %vm429 = vcmp.eq.s32.totalorder %v421, 1
        %vm430 = vcmp.eq.s32.totalorder %v422, 1
        %vm431 = vcmp.eq.s32.totalorder %v423, 1
        %vm432 = vcmp.eq.s32.totalorder %v424, 1
        %v433 = vsel %vm425, %v337, 0.0
        %v434 = vsel %vm426, %v338, 0.0
        %v435 = vsel %vm427, %v339, 0.0
        %v436 = vsel %vm428, %v340, 0.0
        %v437 = vsel %vm429, %v341, 0.0
        %v438 = vsel %vm430, %v342, 0.0
        %v439 = vsel %vm431, %v343, 0.0
        %v440 = vsel %vm432, %v344, 0.0
        %v441 = vsel %vm425, %v345, 0.0
        %v442 = vsel %vm426, %v346, 0.0
        %v443 = vsel %vm427, %v347, 0.0
        %v444 = vsel %vm428, %v348, 0.0
        %v445 = vsel %vm429, %v349, 0.0
        %v446 = vsel %vm430, %v350, 0.0
        %v447 = vsel %vm431, %v351, 0.0
        %v448 = vsel %vm432, %v352, 0.0
        %v449 = vsel %vm425, %v353, 0.0
        %v450 = vsel %vm426, %v354, 0.0
        %v451 = vsel %vm427, %v355, 0.0
        %v452 = vsel %vm428, %v356, 0.0
        %v453 = vsel %vm429, %v357, 0.0
        %v454 = vsel %vm430, %v358, 0.0
        %v455 = vsel %vm431, %v359, 0.0
        %v456 = vsel %vm432, %v360, 0.0
        %v457 = vsel %vm425, %v361, 0.0
        %v458 = vsel %vm426, %v362, 0.0
        %v459 = vsel %vm427, %v363, 0.0
        %v460 = vsel %vm428, %v364, 0.0
        %v461 = vsel %vm429, %v365, 0.0
        %v462 = vsel %vm430, %v366, 0.0
        %v463 = vsel %vm431, %v367, 0.0
        %v464 = vsel %vm432, %v368, 0.0
        %v465 = vsel %vm425, %v369, 0.0
        %v466 = vsel %vm426, %v370, 0.0
        %v467 = vsel %vm427, %v371, 0.0
        %v468 = vsel %vm428, %v372, 0.0
        %v469 = vsel %vm429, %v373, 0.0
        %v470 = vsel %vm430, %v374, 0.0
        %v471 = vsel %vm431, %v375, 0.0
        %v472 = vsel %vm432, %v376, 0.0
        %v473 = vsel %vm425, %v377, 0.0
        %v474 = vsel %vm426, %v378, 0.0
        %v475 = vsel %vm427, %v379, 0.0
        %v476 = vsel %vm428, %v380, 0.0
        %v477 = vsel %vm429, %v381, 0.0
        %v478 = vsel %vm430, %v382, 0.0
        %v479 = vsel %vm431, %v383, 0.0
        %v480 = vsel %vm432, %v384, 0.0
        %v481 = vsel %vm425, %v385, 0.0
        %v482 = vsel %vm426, %v386, 0.0
        %v483 = vsel %vm427, %v387, 0.0
        %v484 = vsel %vm428, %v388, 0.0
        %v485 = vsel %vm429, %v389, 0.0
        %v486 = vsel %vm430, %v390, 0.0
        %v487 = vsel %vm431, %v391, 0.0
        %v488 = vsel %vm432, %v392, 0.0
        %v489 = vsel %vm425, %v393, 0.0
        %v490 = vsel %vm426, %v394, 0.0
        %v491 = vsel %vm427, %v395, 0.0
        %v492 = vsel %vm428, %v396, 0.0
        %v493 = vsel %vm429, %v397, 0.0
        %v494 = vsel %vm430, %v398, 0.0
        %v495 = vsel %vm431, %v399, 0.0
        %v496 = vsel %vm432, %v400, 0.0
        %v497 = vsel %vm425, %v401, 0.0
        %v498 = vsel %vm426, %v402, 0.0
        %v499 = vsel %vm427, %v403, 0.0
        %v500 = vsel %vm428, %v404, 0.0
        %v501 = vsel %vm429, %v405, 0.0
        %v502 = vsel %vm430, %v406, 0.0
        %v503 = vsel %vm431, %v407, 0.0
        %v504 = vsel %vm432, %v408, 0.0
        %v505 = vsel %vm425, %v409, 0.0
        %v506 = vsel %vm426, %v410, 0.0
        %v507 = vsel %vm427, %v411, 0.0
        %v508 = vsel %vm428, %v412, 0.0
        %v509 = vsel %vm429, %v413, 0.0
        %v510 = vsel %vm430, %v414, 0.0
        %v511 = vsel %vm431, %v415, 0.0
        %v512 = vsel %vm432, %v416, 0.0
        %v513 = vadd.f32 %v433, %v434
        %v514 = vadd.f32 %v513, %v435
        %v515 = vadd.f32 %v514, %v436
        %v516 = vadd.f32 %v515, %v437
        %v517 = vadd.f32 %v516, %v438
        %v518 = vadd.f32 %v517, %v439
        %v519 = vadd.f32 %v518, %v440
        %520 = vadd.xlane.f32.xlu0 %v519
        %v521 = vpop.xlane.xlu0 %520
        %v522 = vadd.f32 %v441, %v442
        %v523 = vadd.f32 %v522, %v443
        %v524 = vadd.f32 %v523, %v444
        %v525 = vadd.f32 %v524, %v445
        %v526 = vadd.f32 %v525, %v446
        %v527 = vadd.f32 %v526, %v447
        %v528 = vadd.f32 %v527, %v448
        %529 = vadd.xlane.f32.xlu0 %v528
        %v530 = vpop.xlane.xlu0 %529
        %v531 = vadd.f32 %v449, %v450
        %v532 = vadd.f32 %v531, %v451
        %v533 = vadd.f32 %v532, %v452
        %v534 = vadd.f32 %v533, %v453
        %v535 = vadd.f32 %v534, %v454
        %v536 = vadd.f32 %v535, %v455
        %v537 = vadd.f32 %v536, %v456
        %538 = vadd.xlane.f32.xlu0 %v537
        %v539 = vpop.xlane.xlu0 %538
        %v540 = vadd.f32 %v457, %v458
        %v541 = vadd.f32 %v540, %v459
        %v542 = vadd.f32 %v541, %v460
        %v543 = vadd.f32 %v542, %v461
        %v544 = vadd.f32 %v543, %v462
        %v545 = vadd.f32 %v544, %v463
        %v546 = vadd.f32 %v545, %v464
        %547 = vadd.xlane.f32.xlu0 %v546
        %v548 = vpop.xlane.xlu0 %547
        %v549 = vadd.f32 %v465, %v466
        %v550 = vadd.f32 %v549, %v467
        %v551 = vadd.f32 %v550, %v468
        %v552 = vadd.f32 %v551, %v469
        %v553 = vadd.f32 %v552, %v470
        %v554 = vadd.f32 %v553, %v471
        %v555 = vadd.f32 %v554, %v472
        %556 = vadd.xlane.f32.xlu0 %v555
        %v557 = vpop.xlane.xlu0 %556
        %v558 = vadd.f32 %v473, %v474
        %v559 = vadd.f32 %v558, %v475
        %v560 = vadd.f32 %v559, %v476
        %v561 = vadd.f32 %v560, %v477
        %v562 = vadd.f32 %v561, %v478
        %v563 = vadd.f32 %v562, %v479
        %v564 = vadd.f32 %v563, %v480
        %565 = vadd.xlane.f32.xlu0 %v564
        %v566 = vpop.xlane.xlu0 %565
        %v567 = vadd.f32 %v481, %v482
        %v568 = vadd.f32 %v567, %v483
        %v569 = vadd.f32 %v568, %v484
        %v570 = vadd.f32 %v569, %v485
        %v571 = vadd.f32 %v570, %v486
        %v572 = vadd.f32 %v571, %v487
        %v573 = vadd.f32 %v572, %v488
        %574 = vadd.xlane.f32.xlu0 %v573
        %v575 = vpop.xlane.xlu0 %574
        %v576 = vadd.f32 %v489, %v490
        %v577 = vadd.f32 %v576, %v491
        %v578 = vadd.f32 %v577, %v492
        %v579 = vadd.f32 %v578, %v493
        %v580 = vadd.f32 %v579, %v494
        %v581 = vadd.f32 %v580, %v495
        %v582 = vadd.f32 %v581, %v496
        %583 = vadd.xlane.f32.xlu0 %v582
        %v584 = vpop.xlane.xlu0 %583
        %v585 = vadd.f32 %v497, %v498
        %v586 = vadd.f32 %v585, %v499
        %v587 = vadd.f32 %v586, %v500
        %v588 = vadd.f32 %v587, %v501
        %v589 = vadd.f32 %v588, %v502
        %v590 = vadd.f32 %v589, %v503
        %v591 = vadd.f32 %v590, %v504
        %592 = vadd.xlane.f32.xlu0 %v591
        %v593 = vpop.xlane.xlu0 %592
        %v594 = vadd.f32 %v505, %v506
        %v595 = vadd.f32 %v594, %v507
        %v596 = vadd.f32 %v595, %v508
        %v597 = vadd.f32 %v596, %v509
        %v598 = vadd.f32 %v597, %v510
        %v599 = vadd.f32 %v598, %v511
        %v600 = vadd.f32 %v599, %v512
        %601 = vadd.xlane.f32.xlu0 %v600
        %v602 = vpop.xlane.xlu0 %601
        %v603 = vmul.f32 %v433, %v433
        %v604 = vmul.f32 %v434, %v434
        %v605 = vmul.f32 %v435, %v435
        %v606 = vmul.f32 %v436, %v436
        %v607 = vmul.f32 %v437, %v437
        %v608 = vmul.f32 %v438, %v438
        %v609 = vmul.f32 %v439, %v439
        %v610 = vmul.f32 %v440, %v440
        %v611 = vmul.f32 %v441, %v441
        %v612 = vmul.f32 %v442, %v442
        %v613 = vmul.f32 %v443, %v443
        %v614 = vmul.f32 %v444, %v444
        %v615 = vmul.f32 %v445, %v445
        %v616 = vmul.f32 %v446, %v446
        %v617 = vmul.f32 %v447, %v447
        %v618 = vmul.f32 %v448, %v448
        %v619 = vmul.f32 %v449, %v449
        %v620 = vmul.f32 %v450, %v450
        %v621 = vmul.f32 %v451, %v451
        %v622 = vmul.f32 %v452, %v452
        %v623 = vmul.f32 %v453, %v453
        %v624 = vmul.f32 %v454, %v454
        %v625 = vmul.f32 %v455, %v455
        %v626 = vmul.f32 %v456, %v456
        %v627 = vmul.f32 %v457, %v457
        %v628 = vmul.f32 %v458, %v458
        %v629 = vmul.f32 %v459, %v459
        %v630 = vmul.f32 %v460, %v460
        %v631 = vmul.f32 %v461, %v461
        %v632 = vmul.f32 %v462, %v462
        %v633 = vmul.f32 %v463, %v463
        %v634 = vmul.f32 %v464, %v464
        %v635 = vmul.f32 %v465, %v465
        %v636 = vmul.f32 %v466, %v466
        %v637 = vmul.f32 %v467, %v467
        %v638 = vmul.f32 %v468, %v468
        %v639 = vmul.f32 %v469, %v469
        %v640 = vmul.f32 %v470, %v470
        %v641 = vmul.f32 %v471, %v471
        %v642 = vmul.f32 %v472, %v472
        %v643 = vmul.f32 %v473, %v473
        %v644 = vmul.f32 %v474, %v474
        %v645 = vmul.f32 %v475, %v475
        %v646 = vmul.f32 %v476, %v476
        %v647 = vmul.f32 %v477, %v477
        %v648 = vmul.f32 %v478, %v478
        %v649 = vmul.f32 %v479, %v479
        %v650 = vmul.f32 %v480, %v480
        %v651 = vmul.f32 %v481, %v481
        %v652 = vmul.f32 %v482, %v482
        %v653 = vmul.f32 %v483, %v483
        %v654 = vmul.f32 %v484, %v484
        %v655 = vmul.f32 %v485, %v485
        %v656 = vmul.f32 %v486, %v486
        %v657 = vmul.f32 %v487, %v487
        %v658 = vmul.f32 %v488, %v488
        %v659 = vmul.f32 %v489, %v489
        %v660 = vmul.f32 %v490, %v490
        %v661 = vmul.f32 %v491, %v491
        %v662 = vmul.f32 %v492, %v492
        %v663 = vmul.f32 %v493, %v493
        %v664 = vmul.f32 %v494, %v494
        %v665 = vmul.f32 %v495, %v495
        %v666 = vmul.f32 %v496, %v496
        %v667 = vmul.f32 %v497, %v497
        %v668 = vmul.f32 %v498, %v498
        %v669 = vmul.f32 %v499, %v499
        %v670 = vmul.f32 %v500, %v500
        %v671 = vmul.f32 %v501, %v501
        %v672 = vmul.f32 %v502, %v502
        %v673 = vmul.f32 %v503, %v503
        %v674 = vmul.f32 %v504, %v504
        %v675 = vmul.f32 %v505, %v505
        %v676 = vmul.f32 %v506, %v506
        %v677 = vmul.f32 %v507, %v507
        %v678 = vmul.f32 %v508, %v508
        %v679 = vmul.f32 %v509, %v509
        %v680 = vmul.f32 %v510, %v510
        %v681 = vmul.f32 %v511, %v511
        %v682 = vmul.f32 %v512, %v512
        %v683 = vadd.f32 %v603, %v604
        %v684 = vadd.f32 %v683, %v605
        %v685 = vadd.f32 %v684, %v606
        %v686 = vadd.f32 %v685, %v607
        %v687 = vadd.f32 %v686, %v608
        %v688 = vadd.f32 %v687, %v609
        %v689 = vadd.f32 %v688, %v610
        %690 = vadd.xlane.f32.xlu0 %v689
        %v691 = vpop.xlane.xlu0 %690
        %v692 = vadd.f32 %v611, %v612
        %v693 = vadd.f32 %v692, %v613
        %v694 = vadd.f32 %v693, %v614
        %v695 = vadd.f32 %v694, %v615
        %v696 = vadd.f32 %v695, %v616
        %v697 = vadd.f32 %v696, %v617
        %v698 = vadd.f32 %v697, %v618
        %699 = vadd.xlane.f32.xlu0 %v698
        %v700 = vpop.xlane.xlu0 %699
        %v701 = vadd.f32 %v619, %v620
        %v702 = vadd.f32 %v701, %v621
        %v703 = vadd.f32 %v702, %v622
        %v704 = vadd.f32 %v703, %v623
        %v705 = vadd.f32 %v704, %v624
        %v706 = vadd.f32 %v705, %v625
        %v707 = vadd.f32 %v706, %v626
        %708 = vadd.xlane.f32.xlu0 %v707
        %v709 = vpop.xlane.xlu0 %708
        %v710 = vadd.f32 %v627, %v628
        %v711 = vadd.f32 %v710, %v629
        %v712 = vadd.f32 %v711, %v630
        %v713 = vadd.f32 %v712, %v631
        %v714 = vadd.f32 %v713, %v632
        %v715 = vadd.f32 %v714, %v633
        %v716 = vadd.f32 %v715, %v634
        %717 = vadd.xlane.f32.xlu0 %v716
        %v718 = vpop.xlane.xlu0 %717
        %v719 = vadd.f32 %v635, %v636
        %v720 = vadd.f32 %v719, %v637
        %v721 = vadd.f32 %v720, %v638
        %v722 = vadd.f32 %v721, %v639
        %v723 = vadd.f32 %v722, %v640
        %v724 = vadd.f32 %v723, %v641
        %v725 = vadd.f32 %v724, %v642
        %726 = vadd.xlane.f32.xlu0 %v725
        %v727 = vpop.xlane.xlu0 %726
        %v728 = vadd.f32 %v643, %v644
        %v729 = vadd.f32 %v728, %v645
        %v730 = vadd.f32 %v729, %v646
        %v731 = vadd.f32 %v730, %v647
        %v732 = vadd.f32 %v731, %v648
        %v733 = vadd.f32 %v732, %v649
        %v734 = vadd.f32 %v733, %v650
        %735 = vadd.xlane.f32.xlu0 %v734
        %v736 = vpop.xlane.xlu0 %735
        %v737 = vadd.f32 %v651, %v652
        %v738 = vadd.f32 %v737, %v653
        %v739 = vadd.f32 %v738, %v654
        %v740 = vadd.f32 %v739, %v655
        %v741 = vadd.f32 %v740, %v656
        %v742 = vadd.f32 %v741, %v657
        %v743 = vadd.f32 %v742, %v658
        %744 = vadd.xlane.f32.xlu0 %v743
        %v745 = vpop.xlane.xlu0 %744
        %v746 = vadd.f32 %v659, %v660
        %v747 = vadd.f32 %v746, %v661
        %v748 = vadd.f32 %v747, %v662
        %v749 = vadd.f32 %v748, %v663
        %v750 = vadd.f32 %v749, %v664
        %v751 = vadd.f32 %v750, %v665
        %v752 = vadd.f32 %v751, %v666
        %753 = vadd.xlane.f32.xlu0 %v752
        %v754 = vpop.xlane.xlu0 %753
        %v755 = vadd.f32 %v667, %v668
        %v756 = vadd.f32 %v755, %v669
        %v757 = vadd.f32 %v756, %v670
        %v758 = vadd.f32 %v757, %v671
        %v759 = vadd.f32 %v758, %v672
        %v760 = vadd.f32 %v759, %v673
        %v761 = vadd.f32 %v760, %v674
        %762 = vadd.xlane.f32.xlu0 %v761
        %v763 = vpop.xlane.xlu0 %762
        %v764 = vadd.f32 %v675, %v676
        %v765 = vadd.f32 %v764, %v677
        %v766 = vadd.f32 %v765, %v678
        %v767 = vadd.f32 %v766, %v679
        %v768 = vadd.f32 %v767, %v680
        %v769 = vadd.f32 %v768, %v681
        %v770 = vadd.f32 %v769, %v682
        %771 = vadd.xlane.f32.xlu0 %v770
        %v772 = vpop.xlane.xlu0 %771
        %v773 = vld [vmem:[%s205] sm:$0xff]
        %v774 = vld [vmem:[%s205 + $0x8] sm:$0xff]
        %v775 = vld [vmem:[%s205 + $0x10] sm:$0xff]
        %v776 = vld [vmem:[%s205 + $0x18] sm:$0xff]
        %v777 = vld [vmem:[%s205 + $0x20] sm:$0xff]
        %v778 = vld [vmem:[%s205 + $0x28] sm:$0xff]
        %v779 = vld [vmem:[%s205 + $0x30] sm:$0xff]
        %v780 = vld [vmem:[%s205 + $0x38] sm:$0xff]
        %v781 = vld [vmem:[%s205 + $0x40] sm:$0xff]
        %v782 = vld [vmem:[%s205 + $0x48] sm:$0xff]
        %vm783 = vcmask 7168
        %v784 = vsel %vm783, %v521, %v691
        %v785 = vsel %vm783, %v530, %v700
        %v786 = vsel %vm783, %v539, %v709
        %v787 = vsel %vm783, %v548, %v718
        %v788 = vsel %vm783, %v557, %v727
        %v789 = vsel %vm783, %v566, %v736
        %v790 = vsel %vm783, %v575, %v745
        %v791 = vsel %vm783, %v584, %v754
        %v792 = vsel %vm783, %v593, %v763
        %v793 = vsel %vm783, %v602, %v772
        %v794 = vadd.f32 %v773, %v784
        %v795 = vadd.f32 %v774, %v785
        %v796 = vadd.f32 %v775, %v786
        %v797 = vadd.f32 %v776, %v787
        %v798 = vadd.f32 %v777, %v788
        %v799 = vadd.f32 %v778, %v789
        %v800 = vadd.f32 %v779, %v790
        %v801 = vadd.f32 %v780, %v791
        %v802 = vadd.f32 %v781, %v792
        %v803 = vadd.f32 %v782, %v793
        %vm804 = vcmask 15360
        %805 = vst.msk [vmem:[%s205] sm:$0xff] %vm804, %v794
        %806 = vst.msk [vmem:[%s205 + $0x8] sm:$0xff] %vm804, %v795
        %807 = vst.msk [vmem:[%s205 + $0x10] sm:$0xff] %vm804, %v796
        %808 = vst.msk [vmem:[%s205 + $0x18] sm:$0xff] %vm804, %v797
        %809 = vst.msk [vmem:[%s205 + $0x20] sm:$0xff] %vm804, %v798
        %810 = vst.msk [vmem:[%s205 + $0x28] sm:$0xff] %vm804, %v799
        %811 = vst.msk [vmem:[%s205 + $0x30] sm:$0xff] %vm804, %v800
        %812 = vst.msk [vmem:[%s205 + $0x38] sm:$0xff] %vm804, %v801
        %813 = vst.msk [vmem:[%s205 + $0x40] sm:$0xff] %vm804, %v802
        %814 = vst.msk [vmem:[%s205 + $0x48] sm:$0xff] %vm804, %v803
        %825 = vrot.lane.b32.xlu0 %v237, 4
        %v826 = vpop.permute.xlu0 %825
        %827 = vrot.lane.b32.xlu0 %v245, 4
        %v828 = vpop.permute.xlu0 %827
        %829 = vrot.lane.b32.xlu0 %v253, 4
        %v830 = vpop.permute.xlu0 %829
        %831 = vrot.lane.b32.xlu0 %v261, 4
        %v832 = vpop.permute.xlu0 %831
        %833 = vrot.lane.b32.xlu0 %v269, 4
        %v834 = vpop.permute.xlu0 %833
        %835 = vrot.lane.b32.xlu0 %v277, 4
        %v836 = vpop.permute.xlu0 %835
        %837 = vrot.lane.b32.xlu0 %v285, 4
        %v838 = vpop.permute.xlu0 %837
        %839 = vrot.lane.b32.xlu0 %v293, 4
        %v840 = vpop.permute.xlu0 %839
        %841 = vrot.lane.b32.xlu0 %v301, 4
        %v842 = vpop.permute.xlu0 %841
        %843 = vrot.lane.b32.xlu0 %v309, 4
        %v844 = vpop.permute.xlu0 %843
        %v855 = vsel %vm804, %v230, %v826
        %v856 = vsel %vm804, %v238, %v828
        %v857 = vsel %vm804, %v246, %v830
        %v858 = vsel %vm804, %v254, %v832
        %v859 = vsel %vm804, %v262, %v834
        %v860 = vsel %vm804, %v270, %v836
        %v861 = vsel %vm804, %v278, %v838
        %v862 = vsel %vm804, %v286, %v840
        %v863 = vsel %vm804, %v294, %v842
        %v864 = vsel %vm804, %v302, %v844
        %vm865 = vcmask 31744
        %866 = vst.msk [vmem:[%s214] sm:$0xff] %vm865, %v855
        %867 = vst.msk [vmem:[%s214 + $0x8] sm:$0xff] %vm865, %v856
        %868 = vst.msk [vmem:[%s214 + $0x10] sm:$0xff] %vm865, %v857
        %869 = vst.msk [vmem:[%s214 + $0x18] sm:$0xff] %vm865, %v858
        %870 = vst.msk [vmem:[%s214 + $0x20] sm:$0xff] %vm865, %v859
        %871 = vst.msk [vmem:[%s214 + $0x28] sm:$0xff] %vm865, %v860
        %872 = vst.msk [vmem:[%s214 + $0x30] sm:$0xff] %vm865, %v861
        %873 = vst.msk [vmem:[%s214 + $0x38] sm:$0xff] %vm865, %v862
        %874 = vst.msk [vmem:[%s214 + $0x40] sm:$0xff] %vm865, %v863
        %875 = vst.msk [vmem:[%s214 + $0x48] sm:$0xff] %vm865, %v864
        %p876 = scmp.lt.s32.totalorder %s21, 1
        %s877 = scalar_select %p876, %s21, 1
        %s878 = smul.addr %s877, 10
        %s879 = smul.addr %s878, 8
        %s880 = scalar_lea.vmem %s1, %s879
        %p881 = scmp.lt.s32.totalorder %s21, 1
        %s882 = scalar_select %p881, %s21, 1
        %p883 = scmp.lt.s32.totalorder %s22, 2
        %s884 = scalar_select %p883, %s22, 2
        %s885 = smul.addr %s884, 10
        %s886 = smul.addr %s882, 30
        %s887 = sadd.s32 %s885, %s886
        %s888 = smul.addr %s887, 8
        %s889 = scalar_lea.vmem %s2, %s888
        // Predicated region
        $region33: #{tpu_custom_call.1} parent=23 // pred_check
          %p890 = pneg %p75
        $region34: #{tpu_custom_call.1} parent=23 // pred_check_branch
          %892 = sbr.rel (%p890) target = $region36
        $region35: #{tpu_custom_call.1} parent=23 // pred_region
          _
        $region36: #{tpu_custom_call.1} parent=23 // pred_fallthru
          _
        // Predicated region
        $region37: #{tpu_custom_call.1} parent=23 // pred_check
          %p893 = pneg %p103
        $region38: #{tpu_custom_call.1} parent=23 // pred_check_branch
          %895 = sbr.rel (%p893) target = $region40
        $region39: #{tpu_custom_call.1} parent=23 // pred_region
          _
        $region40: #{tpu_custom_call.1} parent=23 // pred_fallthru
          _
      $region24: #{tpu_custom_call.1} parent=5 // pred_fallthru
        _
      %p896 = scmp.le.s32.totalorder 2, %s12
      // Predicated region
      $region41: #{tpu_custom_call.1} parent=5 // pred_check
        %p897 = pneg %p896
      $region42: #{tpu_custom_call.1} parent=5 // pred_check_branch
        %899 = sbr.rel (%p897) target = $region44
      $region43: #{tpu_custom_call.1} parent=5 // pred_region
        %s900 = ssub.s32 %s12, 2
        // Predicated region
        $region45: #{tpu_custom_call.1} parent=43 // pred_check
          %p901 = pneg %p81
        $region46: #{tpu_custom_call.1} parent=43 // pred_check_branch
          %903 = sbr.rel (%p901) target = $region48
        $region47: #{tpu_custom_call.1} parent=43 // pred_region
          %p904 = scmp.lt.s32.totalorder %s23, 1
          %s905 = scalar_select %p904, %s23, 1
          %s906 = smul.addr %s905, 10
          %s907 = smul.addr %s906, 8
          %s908 = scalar_lea.vmem %s1, %s907
        $region48: #{tpu_custom_call.1} parent=43 // pred_fallthru
          _
        // Predicated region
        $region49: #{tpu_custom_call.1} parent=43 // pred_check
          %p909 = pneg %p109
        $region50: #{tpu_custom_call.1} parent=43 // pred_check_branch
          %911 = sbr.rel (%p909) target = $region52
        $region51: #{tpu_custom_call.1} parent=43 // pred_region
          %p912 = scmp.lt.s32.totalorder %s23, 1
          %s913 = scalar_select %p912, %s23, 1
          %p914 = scmp.lt.s32.totalorder %s24, 2
          %s915 = scalar_select %p914, %s24, 2
          %s916 = smul.addr %s915, 10
          %s917 = smul.addr %s913, 30
          %s918 = sadd.s32 %s916, %s917
          %s919 = smul.addr %s918, 8
          %s920 = scalar_lea.vmem %s2, %s919
        $region52: #{tpu_custom_call.1} parent=43 // pred_fallthru
          _
      $region44: #{tpu_custom_call.1} parent=5 // pred_fallthru
        _
    $region6: #{tpu_custom_call.1} parent=1 // loop_footer
      %s16 = sadd.s32 1, %s12
    $region7: #{tpu_custom_call.1} parent=1 // loop_footer_branch
      %11 = sbr.rel target = $region3
    $region8: #{tpu_custom_call.1} parent=1 // loop_exit
      _
    %921 = vsyncpa [#allocation3], 1
    %s922 = scalar_lea.sflag [#allocation3], 1
    %923 = vsyncpa %s922, 1

</llo_original>
